<compile_context>
chip_gen: v7x
topology: tpu7x:2x2x1
jax: 0.10.0
libtpu: 0.0.40
codegen_flags: <defaults>
</compile_context>

<pallas_src>
import random

import jax
import jax.numpy as jnp
from jax.experimental import pallas as pl
from jax.experimental.pallas import tpu as pltpu

C_IN = 64
C_OUT = 64


# ----------------------------- Pallas kernel --------------------------------
def _fused_conv1x1_sigmoid_kernel(w_ref, b_ref, x1_ref, x2_ref, x3_ref,
                                  o1_ref, o2_ref, o3_ref):
    # w_ref: (C_OUT, C_IN)   b_ref: (C_OUT, 1)
    # x*_ref: (1, C_IN, T)   o*_ref: (1, C_OUT, T)
    w = w_ref[...]
    b = b_ref[...]
    for x_ref, o_ref in ((x1_ref, o1_ref), (x2_ref, o2_ref), (x3_ref, o3_ref)):
        x = x_ref[0]                                            # (C_IN, T)
        acc = jnp.dot(w, x, preferred_element_type=jnp.float32) + b
        # sigmoid(x) == 0.5 * tanh(0.5 * x) + 0.5 : single EUP op, no overflow.
        o_ref[0] = (0.5 * jnp.tanh(0.5 * acc) + 0.5).astype(o_ref.dtype)


def _pick_spatial_tile(n, hw, max_tile=4096):
    """Spatial lane tile T.

    Prefers a tile that divides hw (no masked edge) and is a multiple of 128;
    keeps the parallel grid >= 2 steps when possible (v7x has 2 TensorCores);
    never falls back to an unbounded full-HW block for large hw.
    """
    if hw <= max_tile:
        t = hw
        # Keep both TensorCores busy on v7x when batch == 1.
        if n == 1 and hw % 256 == 0 and hw >= 256:
            t = hw // 2
        return t
    for t in range(max_tile, 127, -128):
        if hw % t == 0:
            return t
    # No clean divisor: fixed tile, grid uses cdiv and masks the edge block.
    return 2048


def fused_conv1x1_sigmoid(x1, x2, x3, weight, bias):
    """sigmoid(Conv2d(64, 64, 1)(x)) for three NCHW float32 inputs, one call."""
    N, C, H, W = x1.shape
    assert C == C_IN and x2.shape == x1.shape and x3.shape == x1.shape
    HW = H * W
    T = _pick_spatial_tile(N, HW)
    grid = (N, pl.cdiv(HW, T))

    # Accept PyTorch-shaped (C_OUT, C_IN, 1, 1) weights as well.
    w2 = weight.reshape(C_OUT, C_IN)
    b2 = bias.reshape(C_OUT, 1)

    # Free reshapes only -- no transpose, no pad.
    xs = [x.reshape(N, C_IN, HW) for x in (x1, x2, x3)]

    x_spec = pl.BlockSpec((1, C_IN, T), lambda n, t: (n, 0, t))
    o_spec = pl.BlockSpec((1, C_OUT, T), lambda n, t: (n, 0, t))
    w_spec = pl.BlockSpec((C_OUT, C_IN), lambda n, t: (0, 0))
    b_spec = pl.BlockSpec((C_OUT, 1), lambda n, t: (0, 0))

    out_shape = tuple(
        jax.ShapeDtypeStruct((N, C_OUT, HW), x1.dtype) for _ in range(3))

    # Explicit VMEM budget from the tile math:
    #   6 tiled arrays (3 in + 3 out) x 2 buffers x 64 * T * 4 B  + params + headroom
    vmem_bytes = 2 * 6 * C_IN * T * 4 + 2 * (C_OUT * C_IN + C_OUT * 128) * 4
    vmem_limit = int(min(max(vmem_bytes + (2 << 20), 16 << 20), 100 << 20))

    o1, o2, o3 = pl.pallas_call(
        _fused_conv1x1_sigmoid_kernel,
        out_shape=out_shape,
        grid=grid,
        in_specs=[w_spec, b_spec, x_spec, x_spec, x_spec],
        out_specs=[o_spec, o_spec, o_spec],
        compiler_params=pltpu.CompilerParams(
            dimension_semantics=("parallel", "parallel"),
            vmem_limit_bytes=vmem_limit),
    )(w2, b2, *xs)

    return tuple(o.reshape(N, C_OUT, H, W) for o in (o1, o2, o3))


# ----------------------- RandomAugmentation (host glue) ---------------------
def random_augmentation(x, key, prob=0.5):
    """Mirrors RandomAugmentation.forward: Python-level branch randomness
    (like `random` in the reference), tensor randomness from a JAX key."""
    if random.random() < prob:
        choice = random.randint(0, 2)
        if choice == 0:        # random_mask
            mask = (jax.random.uniform(key, x.shape, x.dtype) > 0.5).astype(x.dtype)
            x = x * mask
        elif choice == 1:      # random_rotate
            k = random.randint(0, 3)
            x = jnp.rot90(x, k, axes=(2, 3))
        else:                  # add_noise
            x = x + jax.random.normal(key, x.shape, x.dtype) * 0.1
    return x


# ------------------------------ Model forward -------------------------------
def model_forward(x1, x2, x3, weight, bias, aug_key):
    x1_aug = random_augmentation(x1, aug_key, prob=0.5)

    # TODO(synk): Aug has no forward() in the reference source (nn.Module would
    # raise NotImplementedError on self.aug(x2)); treated as identity here.
    x2_aug, x3_aug = x2, x3

    f1, f2, f3 = fused_conv1x1_sigmoid(x1_aug, x2_aug, x3_aug, weight, bias)

    # TODO(synk): vggfeature() is not defined in the provided source; treated
    # as an identity feature extractor (returns its three inputs unchanged).
    return f1, f2, f3


# ----------------------------------- main ------------------------------------
if __name__ == "__main__":
    random.seed(0)
    key = jax.random.PRNGKey(0)
    k1, k2, k3, kw, kb, kaug = jax.random.split(key, 6)

    # Small shapes consistent with Conv2d(64, 64, kernel_size=1): NCHW,
    # H*W = 256 so the spatial lane dimension is a clean multiple of 128.
    N, H, W = 2, 16, 16
    x1 = jax.random.normal(k1, (N, C_IN, H, W), jnp.float32)
    x2 = jax.random.normal(k2, (N, C_IN, H, W), jnp.float32)
    x3 = jax.random.normal(k3, (N, C_IN, H, W), jnp.float32)

    # Deterministic parameter init (PyTorch conv1 weight: (C_out, C_in, 1, 1)).
    weight = jax.random.normal(kw, (C_OUT, C_IN, 1, 1), jnp.float32) / jnp.sqrt(C_IN)
    bias = jax.random.normal(kb, (C_OUT,), jnp.float32) * 0.01

    f1, f2, f3 = model_forward(x1, x2, x3, weight, bias, kaug)
    jax.block_until_ready((f1, f2, f3))

    assert f1.shape == (N, C_OUT, H, W)
    assert f2.shape == (N, C_OUT, H, W)
    assert f3.shape == (N, C_OUT, H, W)

    # Numerical check on the deterministic (non-augmented) paths against a
    # pure-JAX reference.
    def ref_conv_sigmoid(x):
        w2 = weight.reshape(C_OUT, C_IN)
        y = jnp.einsum("oc,nchw->nohw", w2, x) + bias[None, :, None, None]
        return jax.nn.sigmoid(y)

    assert jnp.allclose(f2, ref_conv_sigmoid(x2), atol=1e-3, rtol=1e-3)
    assert jnp.allclose(f3, ref_conv_sigmoid(x3), atol=1e-3, rtol=1e-3)
    assert bool(jnp.all(jnp.isfinite(f1)))

    print("KERNEL_OK")
</pallas_src>

<mosaic_0001>
module attributes {stable_mosaic.version = 11 : i64} {
  func.func @_fused_conv1x1_sigmoid_kernel(%arg0: i32, %arg1: i32, %arg2: memref<64x64xf32, #tpu.memory_space<vmem>>, %arg3: memref<64x1xf32, #tpu.memory_space<vmem>>, %arg4: memref<1x64x256xf32, #tpu.memory_space<vmem>>, %arg5: memref<1x64x256xf32, #tpu.memory_space<vmem>>, %arg6: memref<1x64x256xf32, #tpu.memory_space<vmem>>, %arg7: memref<1x64x256xf32, #tpu.memory_space<vmem>>, %arg8: memref<1x64x256xf32, #tpu.memory_space<vmem>>, %arg9: memref<1x64x256xf32, #tpu.memory_space<vmem>>) attributes {dimension_semantics = [#tpu.dimension_semantics<parallel>, #tpu.dimension_semantics<parallel>], iteration_bounds = array<i64: 2, 1>, scalar_prefetch = 0 : i64, scratch_operands = 0 : i64, tpu.core_type = #tpu.core_type<tc>, window_params = [{pipeline_mode = #tpu.pipeline_mode<synchronous>, transform_indices = @transform_0, window_bounds = array<i64: 64, 64>}, {pipeline_mode = #tpu.pipeline_mode<synchronous>, transform_indices = @transform_1, window_bounds = array<i64: 64, 1>}, {transform_indices = @transform_2, window_bounds = array<i64: 1, 64, 256>}, {transform_indices = @transform_3, window_bounds = array<i64: 1, 64, 256>}, {transform_indices = @transform_4, window_bounds = array<i64: 1, 64, 256>}, {transform_indices = @transform_5, window_bounds = array<i64: 1, 64, 256>}, {transform_indices = @transform_6, window_bounds = array<i64: 1, 64, 256>}, {transform_indices = @transform_7, window_bounds = array<i64: 1, 64, 256>}]} {
    %c0 = arith.constant 0 : index
    %c0_0 = arith.constant 0 : index
    %0 = vector.load %arg2[%c0, %c0_0] : memref<64x64xf32, #tpu.memory_space<vmem>>, vector<64x64xf32>
    %c0_1 = arith.constant 0 : index
    %c0_2 = arith.constant 0 : index
    %1 = vector.load %arg3[%c0_1, %c0_2] : memref<64x1xf32, #tpu.memory_space<vmem>>, vector<64x1xf32>
    %c0_3 = arith.constant 0 : index
    %c0_4 = arith.constant 0 : index
    %c0_5 = arith.constant 0 : index
    %2 = vector.load %arg4[%c0_3, %c0_4, %c0_5] : memref<1x64x256xf32, #tpu.memory_space<vmem>>, vector<1x64x256xf32>
    %3 = vector.shape_cast %2 : vector<1x64x256xf32> to vector<64x256xf32>
    %cst = arith.constant dense<0.000000e+00> : vector<64x256xf32>
    %4 = tpu.matmul %0, %3, %cst {dimension_numbers = #tpu.dot_dimension_numbers<[1], [0], [0], [1], [0, 0, 1, 1], [], []>} : vector<64x64xf32>, vector<64x256xf32>, vector<64x256xf32> -> vector<64x256xf32>
    %5 = vector.broadcast %1 : vector<64x1xf32> to vector<64x256xf32>
    %6 = arith.addf %4, %5 : vector<64x256xf32>
    %cst_6 = arith.constant 5.000000e-01 : f32
    %7 = vector.broadcast %cst_6 : f32 to vector<64x256xf32>
    %8 = arith.mulf %7, %6 : vector<64x256xf32>
    %9 = math.tanh %8 : vector<64x256xf32>
    %cst_7 = arith.constant 5.000000e-01 : f32
    %10 = vector.broadcast %cst_7 : f32 to vector<64x256xf32>
    %11 = arith.mulf %10, %9 : vector<64x256xf32>
    %cst_8 = arith.constant 5.000000e-01 : f32
    %12 = vector.broadcast %cst_8 : f32 to vector<64x256xf32>
    %13 = arith.addf %11, %12 : vector<64x256xf32>
    %c0_9 = arith.constant 0 : index
    %c0_10 = arith.constant 0 : index
    %c0_11 = arith.constant 0 : index
    %14 = vector.load %arg7[%c0_9, %c0_10, %c0_11] : memref<1x64x256xf32, #tpu.memory_space<vmem>>, vector<1x64x256xf32>
    %15 = vector.shape_cast %14 : vector<1x64x256xf32> to vector<64x256xf32>
    %16 = vector.shape_cast %13 : vector<64x256xf32> to vector<1x64x256xf32>
    tpu.vector_store %arg7[%c0_9, %c0_10, %c0_11], %16 {strides = array<i32>} : memref<1x64x256xf32, #tpu.memory_space<vmem>>, vector<1x64x256xf32>,
    %c0_12 = arith.constant 0 : index
    %c0_13 = arith.constant 0 : index
    %c0_14 = arith.constant 0 : index
    %17 = vector.load %arg5[%c0_12, %c0_13, %c0_14] : memref<1x64x256xf32, #tpu.memory_space<vmem>>, vector<1x64x256xf32>
    %18 = vector.shape_cast %17 : vector<1x64x256xf32> to vector<64x256xf32>
    %cst_15 = arith.constant dense<0.000000e+00> : vector<64x256xf32>
    %19 = tpu.matmul %0, %18, %cst_15 {dimension_numbers = #tpu.dot_dimension_numbers<[1], [0], [0], [1], [0, 0, 1, 1], [], []>} : vector<64x64xf32>, vector<64x256xf32>, vector<64x256xf32> -> vector<64x256xf32>
    %20 = vector.broadcast %1 : vector<64x1xf32> to vector<64x256xf32>
    %21 = arith.addf %19, %20 : vector<64x256xf32>
    %cst_16 = arith.constant 5.000000e-01 : f32
    %22 = vector.broadcast %cst_16 : f32 to vector<64x256xf32>
    %23 = arith.mulf %22, %21 : vector<64x256xf32>
    %24 = math.tanh %23 : vector<64x256xf32>
    %cst_17 = arith.constant 5.000000e-01 : f32
    %25 = vector.broadcast %cst_17 : f32 to vector<64x256xf32>
    %26 = arith.mulf %25, %24 : vector<64x256xf32>
    %cst_18 = arith.constant 5.000000e-01 : f32
    %27 = vector.broadcast %cst_18 : f32 to vector<64x256xf32>
    %28 = arith.addf %26, %27 : vector<64x256xf32>
    %c0_19 = arith.constant 0 : index
    %c0_20 = arith.constant 0 : index
    %c0_21 = arith.constant 0 : index
    %29 = vector.load %arg8[%c0_19, %c0_20, %c0_21] : memref<1x64x256xf32, #tpu.memory_space<vmem>>, vector<1x64x256xf32>
    %30 = vector.shape_cast %29 : vector<1x64x256xf32> to vector<64x256xf32>
    %31 = vector.shape_cast %28 : vector<64x256xf32> to vector<1x64x256xf32>
    tpu.vector_store %arg8[%c0_19, %c0_20, %c0_21], %31 {strides = array<i32>} : memref<1x64x256xf32, #tpu.memory_space<vmem>>, vector<1x64x256xf32>,
    %c0_22 = arith.constant 0 : index
    %c0_23 = arith.constant 0 : index
    %c0_24 = arith.constant 0 : index
    %32 = vector.load %arg6[%c0_22, %c0_23, %c0_24] : memref<1x64x256xf32, #tpu.memory_space<vmem>>, vector<1x64x256xf32>
    %33 = vector.shape_cast %32 : vector<1x64x256xf32> to vector<64x256xf32>
    %cst_25 = arith.constant dense<0.000000e+00> : vector<64x256xf32>
    %34 = tpu.matmul %0, %33, %cst_25 {dimension_numbers = #tpu.dot_dimension_numbers<[1], [0], [0], [1], [0, 0, 1, 1], [], []>} : vector<64x64xf32>, vector<64x256xf32>, vector<64x256xf32> -> vector<64x256xf32>
    %35 = vector.broadcast %1 : vector<64x1xf32> to vector<64x256xf32>
    %36 = arith.addf %34, %35 : vector<64x256xf32>
    %cst_26 = arith.constant 5.000000e-01 : f32
    %37 = vector.broadcast %cst_26 : f32 to vector<64x256xf32>
    %38 = arith.mulf %37, %36 : vector<64x256xf32>
    %39 = math.tanh %38 : vector<64x256xf32>
    %cst_27 = arith.constant 5.000000e-01 : f32
    %40 = vector.broadcast %cst_27 : f32 to vector<64x256xf32>
    %41 = arith.mulf %40, %39 : vector<64x256xf32>
    %cst_28 = arith.constant 5.000000e-01 : f32
    %42 = vector.broadcast %cst_28 : f32 to vector<64x256xf32>
    %43 = arith.addf %41, %42 : vector<64x256xf32>
    %c0_29 = arith.constant 0 : index
    %c0_30 = arith.constant 0 : index
    %c0_31 = arith.constant 0 : index
    %44 = vector.load %arg9[%c0_29, %c0_30, %c0_31] : memref<1x64x256xf32, #tpu.memory_space<vmem>>, vector<1x64x256xf32>
    %45 = vector.shape_cast %44 : vector<1x64x256xf32> to vector<64x256xf32>
    %46 = vector.shape_cast %43 : vector<64x256xf32> to vector<1x64x256xf32>
    tpu.vector_store %arg9[%c0_29, %c0_30, %c0_31], %46 {strides = array<i32>} : memref<1x64x256xf32, #tpu.memory_space<vmem>>, vector<1x64x256xf32>,
    return
  }
  func.func @transform_0(%arg0: i32, %arg1: i32) -> (i32, i32) {
    %c0_i32 = arith.constant 0 : i32
    %c0_i32_0 = arith.constant 0 : i32
    %c0_i32_1 = arith.constant 0 : i32
    return %c0_i32, %c0_i32_0 : i32, i32
  }
  func.func @transform_1(%arg0: i32, %arg1: i32) -> (i32, i32) {
    %c0_i32 = arith.constant 0 : i32
    %c0_i32_0 = arith.constant 0 : i32
    %c0_i32_1 = arith.constant 0 : i32
    return %c0_i32, %c0_i32_0 : i32, i32
  }
  func.func @transform_2(%arg0: i32, %arg1: i32) -> (i32, i32, i32) {
    %c0_i32 = arith.constant 0 : i32
    %c0_i32_0 = arith.constant 0 : i32
    return %arg0, %c0_i32, %arg1 : i32, i32, i32
  }
  func.func @transform_3(%arg0: i32, %arg1: i32) -> (i32, i32, i32) {
    %c0_i32 = arith.constant 0 : i32
    %c0_i32_0 = arith.constant 0 : i32
    return %arg0, %c0_i32, %arg1 : i32, i32, i32
  }
  func.func @transform_4(%arg0: i32, %arg1: i32) -> (i32, i32, i32) {
    %c0_i32 = arith.constant 0 : i32
    %c0_i32_0 = arith.constant 0 : i32
    return %arg0, %c0_i32, %arg1 : i32, i32, i32
  }
  func.func @transform_5(%arg0: i32, %arg1: i32) -> (i32, i32, i32) {
    %c0_i32 = arith.constant 0 : i32
    %c0_i32_0 = arith.constant 0 : i32
    return %arg0, %c0_i32, %arg1 : i32, i32, i32
  }
  func.func @transform_6(%arg0: i32, %arg1: i32) -> (i32, i32, i32) {
    %c0_i32 = arith.constant 0 : i32
    %c0_i32_0 = arith.constant 0 : i32
    return %arg0, %c0_i32, %arg1 : i32, i32, i32
  }
  func.func @transform_7(%arg0: i32, %arg1: i32) -> (i32, i32, i32) {
    %c0_i32 = arith.constant 0 : i32
    %c0_i32_0 = arith.constant 0 : i32
    return %arg0, %c0_i32, %arg1 : i32, i32, i32
  }
}

</mosaic_0001>

<llo_original>
// kernel: tpu_custom_call.1
$region0: #{tpu_custom_call.1}
  #allocation0 [shape = 'u32[]', space=smem, size = 0x4, offset = 0x4, fixed_abs, tag = 'smem constant byte address 0x4 - core index']
  #allocation1 [shape = 'u32[144,128]{1,0:T(1,128)}', space=vmem, size = 0x12000, scoped, tag = 'internal scratch']
  %s0 = inlined_call_operand.vmem [shape: f32[64,64], index: 0, kind: input, shape index: {}]
  %s1 = inlined_call_operand.vmem [shape: f32[64,1], index: 1, kind: input, shape index: {}]
  %s2 = inlined_call_operand.hbm [shape: f32[2,64,256], index: 2, kind: input, shape index: {}]
  %s3 = inlined_call_operand.hbm [shape: f32[2,64,256], index: 3, kind: input, shape index: {}]
  %s4 = inlined_call_operand.hbm [shape: f32[2,64,256], index: 4, kind: input, shape index: {}]
  %s5 = inlined_call_operand.hbm [shape: f32[2,64,256], index: 5, kind: output, shape index: {0}]
  %s6 = inlined_call_operand.hbm [shape: f32[2,64,256], index: 6, kind: output, shape index: {1}]
  %s7 = inlined_call_operand.hbm [shape: f32[2,64,256], index: 7, kind: output, shape index: {2}]
  %8 = xla_tuple %s5, %s6, %s7
  %s9 = sld [smem:[#allocation0]]
  $region81: #{tpu_custom_call.1} parent=0
    _
  %s11 = ssub.s32 1, %s9
  %s12 = scalar_select 0, %s11, %s9
  $region1: #{tpu_custom_call.1} parent=0
    #allocation2 [shape = 'u8[131072]{0}', space=vmem, size = 0x20000, scoped, tag = 'input window, operand 2']
    #allocation3 [shape = 's32[2]{0}', space=sflag, size = 0x8, scoped, tag = 'scoped memory for tpu_custom_call.1']
    #allocation4 [shape = 's32[2]{0}', space=sflag, size = 0x8, scoped, tag = 'scoped memory for tpu_custom_call.1']
    #allocation5 [shape = 'u8[131072]{0}', space=vmem, size = 0x20000, scoped, tag = 'input window, operand 3']
    #allocation6 [shape = 's32[2]{0}', space=sflag, size = 0x8, scoped, tag = 'scoped memory for tpu_custom_call.1']
    #allocation7 [shape = 'u8[131072]{0}', space=vmem, size = 0x20000, scoped, tag = 'input window, operand 4']
    #allocation8 [shape = 'u8[131072]{0}', space=vmem, size = 0x20000, scoped, tag = 'output window, operand 0']
    #allocation9 [shape = 'u8[131072]{0}', space=vmem, size = 0x20000, scoped, tag = 'output window, operand 1']
    #allocation10 [shape = 's32[2]{0}', space=sflag, size = 0x8, scoped, tag = 'scoped memory for tpu_custom_call.1']
    #allocation11 [shape = 'u8[131072]{0}', space=vmem, size = 0x20000, scoped, tag = 'output window, operand 2']
    %13 = vsyncpa [#allocation3], 0
    %s14 = scalar_lea.sflag [#allocation3], 1
    %15 = vsyncpa %s14, 0
    %16 = vsyncpa [#allocation6], 0
    %s17 = scalar_lea.sflag [#allocation6], 1
    %18 = vsyncpa %s17, 0
    %19 = vsyncpa [#allocation4], 0
    %s20 = scalar_lea.sflag [#allocation4], 1
    %21 = vsyncpa %s20, 0
    %22 = vsyncpa [#allocation10], 0
    %s23 = scalar_lea.sflag [#allocation10], 1
    %24 = vsyncpa %s23, 0
    loop: start=0, step=1, limit=4
    $region2: #{tpu_custom_call.1} parent=1 // loop_pre_header
      _
    $region3: #{tpu_custom_call.1} parent=1 // loop_header
      %s26 = sphi 0, %s30
      %p27 = scmp.ge.s32.totalorder %s26, 4
      %s33 = sphi 0, %s45
      %s34 = sphi 0, %s41
      %s35 = sphi 0, %s33
      %s36 = sphi 0, %s34
      %s37 = sphi 0, %s35
      %s38 = sphi 0, %s36
      %s46 = sphi 0, %s46
      %s48 = sphi 0, %s46
      %s49 = sphi 0, %s48
      %s63 = sphi 0, %s49
      %s67 = sphi 0, %s67
      %s69 = sphi 0, %s67
      %s70 = sphi 0, %s69
      %s84 = sphi 0, %s70
      %s92 = sphi 0, %s94
      %s95 = sphi 0, %s92
      %s96 = sphi 0, %s95
      %s112 = sphi 0, %s96
      %s120 = sphi 0, %s122
      %s123 = sphi 0, %s120
      %s124 = sphi 0, %s123
      %s140 = sphi 0, %s124
      %s148 = sphi 0, %s150
      %s151 = sphi 0, %s148
      %s152 = sphi 0, %s151
      %s168 = sphi 0, %s152
      %s176 = sphi 0, %s178
      %s179 = sphi 0, %s176
      %s180 = sphi 0, %s179
      %s196 = sphi 0, %s180
      %s204 = sphi 0, %s206
      %s207 = sphi 0, %s204
      %s208 = sphi 0, %s207
      %s224 = sphi 0, %s208
      %s232 = sphi 0, %s234
      %s235 = sphi 0, %s232
      %s236 = sphi 0, %s235
      %s252 = sphi 0, %s236
    $region4: #{tpu_custom_call.1} parent=1 // loop_header_branch
      %29 = sbr.rel (%p27) target = $region8
    $region5: #{tpu_custom_call.1} parent=1 // loop_body
      %s31 = ssub.s32 %s26, 1
      %s32 = ssub.s32 %s26, 2
      %s39 = sadd.s32 1, %s34
      %p40 = scmp.ge.s32.totalorder %s39, 1
      %s41 = scalar_select %p40, 0, %s39
      %s42 = sadd.s32 1, %s33
      %s43 = scalar_select %p40, %s42, %s33
      %p44 = scmp.ge.s32.totalorder %s43, 2
      %s45 = scalar_select %p44, 0, %s43
      %s47 = sadd.s32 %s46, 1
      %p50 = scmp.eq.s32.totalorder %s26, 1
      %p51 = scmp.ne.s32.totalorder %s46, %s48
      %p52 = scmp.eq.s32.totalorder %s26, 0
      %p53 = por %p51, %p52
      %p54 = scmp.ne.s32.totalorder %s46, %s48
      %p55 = scmp.eq.s32.totalorder %s31, 1
      %p56 = por %p54, %p55
      %p57 = scmp.ne.s32.totalorder %s48, %s49
      %p58 = scmp.eq.s32.totalorder %s31, 0
      %p59 = por %p57, %p58
      %p60 = scmp.ne.s32.totalorder %s48, %s49
      %p61 = scmp.eq.s32.totalorder %s32, 1
      %p62 = por %p60, %p61
      %p64 = scmp.ne.s32.totalorder %s49, %s63
      %p65 = scmp.eq.s32.totalorder %s32, 0
      %p66 = por %p64, %p65
      %s68 = sadd.s32 %s67, 1
      %p71 = scmp.eq.s32.totalorder %s26, 1
      %p72 = scmp.ne.s32.totalorder %s67, %s69
      %p73 = scmp.eq.s32.totalorder %s26, 0
      %p74 = por %p72, %p73
      %p75 = scmp.ne.s32.totalorder %s67, %s69
      %p76 = scmp.eq.s32.totalorder %s31, 1
      %p77 = por %p75, %p76
      %p78 = scmp.ne.s32.totalorder %s69, %s70
      %p79 = scmp.eq.s32.totalorder %s31, 0
      %p80 = por %p78, %p79
      %p81 = scmp.ne.s32.totalorder %s69, %s70
      %p82 = scmp.eq.s32.totalorder %s32, 1
      %p83 = por %p81, %p82
      %p85 = scmp.ne.s32.totalorder %s70, %s84
      %p86 = scmp.eq.s32.totalorder %s32, 0
      %p87 = por %p85, %p86
      %s88 = ssub.s32 %s33, %s45
      %s89 = ssub.s32 %s34, %s41
      %s90 = sor.u32 %s88, %s89
      %p91 = scmp.eq.s32.totalorder %s90, 0
      %s93 = sadd.s32 %s92, 1
      %s94 = scalar_select %p91, %s92, %s93
      %p97 = pneg %p91
      %p98 = scmp.eq.s32.totalorder %s26, 1
      %p99 = por %p97, %p98
      %p100 = scmp.ne.s32.totalorder %s92, %s95
      %p101 = scmp.eq.s32.totalorder %s26, 0
      %p102 = por %p100, %p101
      %p103 = scmp.ne.s32.totalorder %s92, %s95
      %p104 = scmp.eq.s32.totalorder %s31, 1
      %p105 = por %p103, %p104
      %p106 = scmp.ne.s32.totalorder %s95, %s96
      %p107 = scmp.eq.s32.totalorder %s31, 0
      %p108 = por %p106, %p107
      %p109 = scmp.ne.s32.totalorder %s95, %s96
      %p110 = scmp.eq.s32.totalorder %s32, 1
      %p111 = por %p109, %p110
      %p113 = scmp.ne.s32.totalorder %s96, %s112
      %p114 = scmp.eq.s32.totalorder %s32, 0
      %p115 = por %p113, %p114
      %s116 = ssub.s32 %s33, %s45
      %s117 = ssub.s32 %s34, %s41
      %s118 = sor.u32 %s116, %s117
      %p119 = scmp.eq.s32.totalorder %s118, 0
      %s121 = sadd.s32 %s120, 1
      %s122 = scalar_select %p119, %s120, %s121
      %p125 = pneg %p119
      %p126 = scmp.eq.s32.totalorder %s26, 1
      %p127 = por %p125, %p126
      %p128 = scmp.ne.s32.totalorder %s120, %s123
      %p129 = scmp.eq.s32.totalorder %s26, 0
      %p130 = por %p128, %p129
      %p131 = scmp.ne.s32.totalorder %s120, %s123
      %p132 = scmp.eq.s32.totalorder %s31, 1
      %p133 = por %p131, %p132
      %p134 = scmp.ne.s32.totalorder %s123, %s124
      %p135 = scmp.eq.s32.totalorder %s31, 0
      %p136 = por %p134, %p135
      %p137 = scmp.ne.s32.totalorder %s123, %s124
      %p138 = scmp.eq.s32.totalorder %s32, 1
      %p139 = por %p137, %p138
      %p141 = scmp.ne.s32.totalorder %s124, %s140
      %p142 = scmp.eq.s32.totalorder %s32, 0
      %p143 = por %p141, %p142
      %s144 = ssub.s32 %s33, %s45
      %s145 = ssub.s32 %s34, %s41
      %s146 = sor.u32 %s144, %s145
      %p147 = scmp.eq.s32.totalorder %s146, 0
      %s149 = sadd.s32 %s148, 1
      %s150 = scalar_select %p147, %s148, %s149
      %p153 = pneg %p147
      %p154 = scmp.eq.s32.totalorder %s26, 1
      %p155 = por %p153, %p154
      %p156 = scmp.ne.s32.totalorder %s148, %s151
      %p157 = scmp.eq.s32.totalorder %s26, 0
      %p158 = por %p156, %p157
      %p159 = scmp.ne.s32.totalorder %s148, %s151
      %p160 = scmp.eq.s32.totalorder %s31, 1
      %p161 = por %p159, %p160
      %p162 = scmp.ne.s32.totalorder %s151, %s152
      %p163 = scmp.eq.s32.totalorder %s31, 0
      %p164 = por %p162, %p163
      %p165 = scmp.ne.s32.totalorder %s151, %s152
      %p166 = scmp.eq.s32.totalorder %s32, 1
      %p167 = por %p165, %p166
      %p169 = scmp.ne.s32.totalorder %s152, %s168
      %p170 = scmp.eq.s32.totalorder %s32, 0
      %p171 = por %p169, %p170
      %s172 = ssub.s32 %s33, %s45
      %s173 = ssub.s32 %s34, %s41
      %s174 = sor.u32 %s172, %s173
      %p175 = scmp.eq.s32.totalorder %s174, 0
      %s177 = sadd.s32 %s176, 1
      %s178 = scalar_select %p175, %s176, %s177
      %p181 = pneg %p175
      %p182 = scmp.eq.s32.totalorder %s26, 1
      %p183 = por %p181, %p182
      %p184 = scmp.ne.s32.totalorder %s176, %s179
      %p185 = scmp.eq.s32.totalorder %s26, 0
      %p186 = por %p184, %p185
      %p187 = scmp.ne.s32.totalorder %s176, %s179
      %p188 = scmp.eq.s32.totalorder %s31, 1
      %p189 = por %p187, %p188
      %p190 = scmp.ne.s32.totalorder %s179, %s180
      %p191 = scmp.eq.s32.totalorder %s31, 0
      %p192 = por %p190, %p191
      %p193 = scmp.ne.s32.totalorder %s179, %s180
      %p194 = scmp.eq.s32.totalorder %s32, 1
      %p195 = por %p193, %p194
      %p197 = scmp.ne.s32.totalorder %s180, %s196
      %p198 = scmp.eq.s32.totalorder %s32, 0
      %p199 = por %p197, %p198
      %s200 = ssub.s32 %s33, %s45
      %s201 = ssub.s32 %s34, %s41
      %s202 = sor.u32 %s200, %s201
      %p203 = scmp.eq.s32.totalorder %s202, 0
      %s205 = sadd.s32 %s204, 1
      %s206 = scalar_select %p203, %s204, %s205
      %p209 = pneg %p203
      %p210 = scmp.eq.s32.totalorder %s26, 1
      %p211 = por %p209, %p210
      %p212 = scmp.ne.s32.totalorder %s204, %s207
      %p213 = scmp.eq.s32.totalorder %s26, 0
      %p214 = por %p212, %p213
      %p215 = scmp.ne.s32.totalorder %s204, %s207
      %p216 = scmp.eq.s32.totalorder %s31, 1
      %p217 = por %p215, %p216
      %p218 = scmp.ne.s32.totalorder %s207, %s208
      %p219 = scmp.eq.s32.totalorder %s31, 0
      %p220 = por %p218, %p219
      %p221 = scmp.ne.s32.totalorder %s207, %s208
      %p222 = scmp.eq.s32.totalorder %s32, 1
      %p223 = por %p221, %p222
      %p225 = scmp.ne.s32.totalorder %s208, %s224
      %p226 = scmp.eq.s32.totalorder %s32, 0
      %p227 = por %p225, %p226
      %s228 = ssub.s32 %s33, %s45
      %s229 = ssub.s32 %s34, %s41
      %s230 = sor.u32 %s228, %s229
      %p231 = scmp.eq.s32.totalorder %s230, 0
      %s233 = sadd.s32 %s232, 1
      %s234 = scalar_select %p231, %s232, %s233
      %p237 = pneg %p231
      %p238 = scmp.eq.s32.totalorder %s26, 1
      %p239 = por %p237, %p238
      %p240 = scmp.ne.s32.totalorder %s232, %s235
      %p241 = scmp.eq.s32.totalorder %s26, 0
      %p242 = por %p240, %p241
      %p243 = scmp.ne.s32.totalorder %s232, %s235
      %p244 = scmp.eq.s32.totalorder %s31, 1
      %p245 = por %p243, %p244
      %p246 = scmp.ne.s32.totalorder %s235, %s236
      %p247 = scmp.eq.s32.totalorder %s31, 0
      %p248 = por %p246, %p247
      %p249 = scmp.ne.s32.totalorder %s235, %s236
      %p250 = scmp.eq.s32.totalorder %s32, 1
      %p251 = por %p249, %p250
      %p253 = scmp.ne.s32.totalorder %s236, %s252
      %p254 = scmp.eq.s32.totalorder %s32, 0
      %p255 = por %p253, %p254
      %p256 = scmp.le.s32.totalorder 1, %s26
      %p257 = scmp.lt.s32.totalorder %s26, 3
      %p258 = pnand %p256, %p257
      %p259 = pneg %p258
      // Predicated region
      $region9: #{tpu_custom_call.1} parent=5 // pred_check
        _
      $region10: #{tpu_custom_call.1} parent=5 // pred_check_branch
        %261 = sbr.rel (%p258) target = $region12
      $region11: #{tpu_custom_call.1} parent=5 // pred_region
        %s262 = ssub.s32 %s26, 1
        // Predicated region
        $region13: #{tpu_custom_call.1} parent=11 // pred_check
          %p263 = pneg %p59
        $region14: #{tpu_custom_call.1} parent=11 // pred_check_branch
          %265 = sbr.rel (%p263) target = $region16
        $region15: #{tpu_custom_call.1} parent=11 // pred_region
          _
        $region16: #{tpu_custom_call.1} parent=11 // pred_fallthru
          _
        // Predicated region
        $region17: #{tpu_custom_call.1} parent=11 // pred_check
          %p266 = pneg %p80
        $region18: #{tpu_custom_call.1} parent=11 // pred_check_branch
          %268 = sbr.rel (%p266) target = $region20
        $region19: #{tpu_custom_call.1} parent=11 // pred_region
          _
        $region20: #{tpu_custom_call.1} parent=11 // pred_fallthru
          _
      $region12: #{tpu_custom_call.1} parent=5 // pred_fallthru
        _
      %p269 = scmp.lt.s32.totalorder %s26, 2
      // Predicated region
      $region21: #{tpu_custom_call.1} parent=5 // pred_check
        %p270 = pneg %p269
      $region22: #{tpu_custom_call.1} parent=5 // pred_check_branch
        %272 = sbr.rel (%p270) target = $region24
      $region23: #{tpu_custom_call.1} parent=5 // pred_region
        // Predicated region
        $region25: #{tpu_custom_call.1} parent=23 // pred_check
          %p273 = pneg %p102
        $region26: #{tpu_custom_call.1} parent=23 // pred_check_branch
          %275 = sbr.rel (%p273) target = $region28
        $region27: #{tpu_custom_call.1} parent=23 // pred_region
          %s276 = sand.u32 %s92, 1
          %s277 = scalar_lea.sflag [#allocation3], %s276
          %s278 = sand.u32 %s92, 1
          %s279 = smul.addr %s278, 128
          %s280 = scalar_lea.vmem [#allocation2], %s279
          %s281 = smul.u32 2, %s34
          %s283 = ssub.s32 2048, 2048
          %284 = vsyncadd %s277, %s283
          %s285 = smul.addr %s33, 16
          %s286 = sadd.s32 %s281, %s285
          %s287 = smul.addr %s286, 128
          %s288 = scalar_lea.hbm %s2, %s287
          %s289 = sshll.u32 %s280, 4
          %s290 = int_to_ptr.vmem [resolvable:$true] %s289
          %295 = dma.hbm_to_vmem [thread:$0]  %s288, 2048, %s290, %s277, 256, 256, 16
        $region28: #{tpu_custom_call.1} parent=23 // pred_fallthru
          _
        // Predicated region
        $region29: #{tpu_custom_call.1} parent=23 // pred_check
          %p296 = pneg %p130
        $region30: #{tpu_custom_call.1} parent=23 // pred_check_branch
          %298 = sbr.rel (%p296) target = $region32
        $region31: #{tpu_custom_call.1} parent=23 // pred_region
          %s299 = sand.u32 %s26, 1
          %s300 = scalar_lea.sflag [#allocation6], %s299
          %s301 = sand.u32 %s120, 1
          %s302 = smul.addr %s301, 128
          %s303 = scalar_lea.vmem [#allocation5], %s302
          %s304 = smul.u32 2, %s34
          %s306 = ssub.s32 2048, 2048
          %307 = vsyncadd %s300, %s306
          %s308 = smul.addr %s33, 16
          %s309 = sadd.s32 %s304, %s308
          %s310 = smul.addr %s309, 128
          %s311 = scalar_lea.hbm %s3, %s310
          %s312 = sshll.u32 %s303, 4
          %s313 = int_to_ptr.vmem [resolvable:$true] %s312
          %318 = dma.hbm_to_vmem [thread:$0]  %s311, 2048, %s313, %s300, 256, 256, 16
        $region32: #{tpu_custom_call.1} parent=23 // pred_fallthru
          _
        // Predicated region
        $region33: #{tpu_custom_call.1} parent=23 // pred_check
          %p319 = pneg %p158
        $region34: #{tpu_custom_call.1} parent=23 // pred_check_branch
          %321 = sbr.rel (%p319) target = $region36
        $region35: #{tpu_custom_call.1} parent=23 // pred_region
          %s322 = sand.u32 %s26, 1
          %s323 = scalar_lea.sflag [#allocation6], %s322
          %s324 = sand.u32 %s148, 1
          %s325 = smul.addr %s324, 128
          %s326 = scalar_lea.vmem [#allocation7], %s325
          %s327 = smul.u32 2, %s34
          %s329 = ssub.s32 2048, 2048
          %330 = vsyncadd %s323, %s329
          %s331 = smul.addr %s33, 16
          %s332 = sadd.s32 %s327, %s331
          %s333 = smul.addr %s332, 128
          %s334 = scalar_lea.hbm %s4, %s333
          %s335 = sshll.u32 %s326, 4
          %s336 = int_to_ptr.vmem [resolvable:$true] %s335
          %341 = dma.hbm_to_vmem [thread:$0]  %s334, 2048, %s336, %s323, 256, 256, 16
        $region36: #{tpu_custom_call.1} parent=23 // pred_fallthru
          _
      $region24: #{tpu_custom_call.1} parent=5 // pred_fallthru
        _
      %p342 = scmp.le.s32.totalorder 1, %s26
      %p343 = scmp.lt.s32.totalorder %s26, 3
      %p344 = pnand %p342, %p343
      %p345 = pneg %p344
      // Predicated region
      $region37: #{tpu_custom_call.1} parent=5 // pred_check
        _
      $region38: #{tpu_custom_call.1} parent=5 // pred_check_branch
        %347 = sbr.rel (%p344) target = $region40
      $region39: #{tpu_custom_call.1} parent=5 // pred_region
        %s348 = ssub.s32 %s26, 1
        %s349 = sand.u32 %s95, 1
        %s350 = scalar_lea.sflag [#allocation3], %s349
        %s351 = sand.u32 %s95, 1
        %s352 = smul.addr %s351, 128
        %s353 = scalar_lea.vmem [#allocation2], %s352
        // Predicated region
        $region41: #{tpu_custom_call.1} parent=39 // pred_check
          %p354 = pneg %p108
        $region42: #{tpu_custom_call.1} parent=39 // pred_check_branch
          %356 = sbr.rel (%p354) target = $region44
        $region43: #{tpu_custom_call.1} parent=39 // pred_region
          %357 = dma.done %s350, 2048
        $region44: #{tpu_custom_call.1} parent=39 // pred_fallthru
          _
        %s358 = sand.u32 %s31, 1
        %s359 = scalar_lea.sflag [#allocation6], %s358
        %s360 = sand.u32 %s123, 1
        %s361 = smul.addr %s360, 128
        %s362 = scalar_lea.vmem [#allocation5], %s361
        // Predicated region
        $region45: #{tpu_custom_call.1} parent=39 // pred_check
          %p363 = pneg %p136
        $region46: #{tpu_custom_call.1} parent=39 // pred_check_branch
          %365 = sbr.rel (%p363) target = $region48
        $region47: #{tpu_custom_call.1} parent=39 // pred_region
          %366 = dma.done %s359, 2048
        $region48: #{tpu_custom_call.1} parent=39 // pred_fallthru
          _
        %s367 = sand.u32 %s31, 1
        %s368 = scalar_lea.sflag [#allocation6], %s367
        %s369 = sand.u32 %s151, 1
        %s370 = smul.addr %s369, 128
        %s371 = scalar_lea.vmem [#allocation7], %s370
        // Predicated region
        $region49: #{tpu_custom_call.1} parent=39 // pred_check
          %p372 = pneg %p164
        $region50: #{tpu_custom_call.1} parent=39 // pred_check_branch
          %374 = sbr.rel (%p372) target = $region52
        $region51: #{tpu_custom_call.1} parent=39 // pred_region
          %375 = dma.done %s368, 2048
        $region52: #{tpu_custom_call.1} parent=39 // pred_fallthru
          _
        %p376 = pneg %p59
        %p377 = pneg %p56
        %p378 = pneg %p80
        %p379 = pneg %p77
        %s380 = sand.u32 %s95, 1
        %s381 = scalar_lea.sflag [#allocation3], %s380
        %s382 = sand.u32 %s95, 1
        %s383 = smul.addr %s382, 128
        %s384 = scalar_lea.vmem [#allocation2], %s383
        %p385 = pneg %p108
        %p386 = pneg %p105
        %s387 = sand.u32 %s31, 1
        %s388 = scalar_lea.sflag [#allocation6], %s387
        %s389 = sand.u32 %s123, 1
        %s390 = smul.addr %s389, 128
        %s391 = scalar_lea.vmem [#allocation5], %s390
        %p392 = pneg %p136
        %p393 = pneg %p133
        %s394 = sand.u32 %s31, 1
        %s395 = scalar_lea.sflag [#allocation6], %s394
        %s396 = sand.u32 %s151, 1
        %s397 = smul.addr %s396, 128
        %s398 = scalar_lea.vmem [#allocation7], %s397
        %p399 = pneg %p164
        %p400 = pneg %p161
        %p401 = pneg %p192
        %p402 = pneg %p189
        %s403 = sand.u32 %s179, 1
        %s404 = scalar_lea.sflag [#allocation4], %s403
        %s405 = sand.u32 %s179, 1
        %s406 = smul.addr %s405, 128
        %s407 = scalar_lea.vmem [#allocation8], %s406
        %p408 = pneg %p220
        %p409 = pneg %p217
        %s410 = sand.u32 %s31, 1
        %s411 = scalar_lea.sflag [#allocation10], %s410
        %s412 = sand.u32 %s207, 1
        %s413 = smul.addr %s412, 128
        %s414 = scalar_lea.vmem [#allocation9], %s413
        %p415 = pneg %p248
        %p416 = pneg %p245
        %s417 = sand.u32 %s31, 1
        %s418 = scalar_lea.sflag [#allocation10], %s417
        %s419 = sand.u32 %s235, 1
        %s420 = smul.addr %s419, 128
        %s421 = scalar_lea.vmem [#allocation11], %s420
        %s422 = smul.u32 2, %s36
        %s423 = smul.u32 2, %s36
        %s424 = smul.u32 2, %s36
        %s425 = smul.u32 2, %s36
        %s426 = smul.u32 2, %s36
        %s427 = smul.u32 2, %s36
        %v428 = vld [vmem:[%s0] sm:$0xff]
        %v429 = vld [vmem:[%s0 + $0x8] sm:$0xff]
        %v430 = vld [vmem:[%s0 + $0x10] sm:$0xff]
        %v431 = vld [vmem:[%s0 + $0x18] sm:$0xff]
        %v432 = vld [vmem:[%s0 + $0x20] sm:$0xff]
        %v433 = vld [vmem:[%s0 + $0x28] sm:$0xff]
        %v434 = vld [vmem:[%s0 + $0x30] sm:$0xff]
        %v435 = vld [vmem:[%s0 + $0x38] sm:$0xff]
        %v436 = vld [vmem:[%s1] sm:$0xff]
        %v437 = vld [vmem:[%s1 + $0x8] sm:$0xff]
        %v438 = vld [vmem:[%s1 + $0x10] sm:$0xff]
        %v439 = vld [vmem:[%s1 + $0x18] sm:$0xff]
        %v440 = vld [vmem:[%s1 + $0x20] sm:$0xff]
        %v441 = vld [vmem:[%s1 + $0x28] sm:$0xff]
        %v442 = vld [vmem:[%s1 + $0x30] sm:$0xff]
        %v443 = vld [vmem:[%s1 + $0x38] sm:$0xff]
        %v444 = vld [vmem:[%s353] sm:$0xff]
        %v445 = vld [vmem:[%s353 + $0x8] sm:$0xff]
        %v446 = vld [vmem:[%s353 + $0x10] sm:$0xff]
        %v447 = vld [vmem:[%s353 + $0x18] sm:$0xff]
        %v448 = vld [vmem:[%s353 + $0x20] sm:$0xff]
        %v449 = vld [vmem:[%s353 + $0x28] sm:$0xff]
        %v450 = vld [vmem:[%s353 + $0x30] sm:$0xff]
        %v451 = vld [vmem:[%s353 + $0x38] sm:$0xff]
        %v452 = vld [vmem:[%s353 + $0x40] sm:$0xff]
        %v453 = vld [vmem:[%s353 + $0x48] sm:$0xff]
        %v454 = vld [vmem:[%s353 + $0x50] sm:$0xff]
        %v455 = vld [vmem:[%s353 + $0x58] sm:$0xff]
        %v456 = vld [vmem:[%s353 + $0x60] sm:$0xff]
        %v457 = vld [vmem:[%s353 + $0x68] sm:$0xff]
        %v458 = vld [vmem:[%s353 + $0x70] sm:$0xff]
        %v459 = vld [vmem:[%s353 + $0x78] sm:$0xff]
        %461 = vset.pattern.permute.xlu0 0
        %462 = vperm.xlu0 %461, %v436
        %v463 = vpop.permute.xlu0 %462
        %466 = vset.pattern.permute.xlu0 0
        %467 = vperm.xlu0 %466, %v437
        %v468 = vpop.permute.xlu0 %467
        %471 = vset.pattern.permute.xlu0 0
        %472 = vperm.xlu0 %471, %v438
        %v473 = vpop.permute.xlu0 %472
        %476 = vset.pattern.permute.xlu0 0
        %477 = vperm.xlu0 %476, %v439
        %v478 = vpop.permute.xlu0 %477
        %481 = vset.pattern.permute.xlu0 0
        %482 = vperm.xlu0 %481, %v440
        %v483 = vpop.permute.xlu0 %482
        %486 = vset.pattern.permute.xlu0 0
        %487 = vperm.xlu0 %486, %v441
        %v488 = vpop.permute.xlu0 %487
        %491 = vset.pattern.permute.xlu0 0
        %492 = vperm.xlu0 %491, %v442
        %v493 = vpop.permute.xlu0 %492
        %496 = vset.pattern.permute.xlu0 0
        %497 = vperm.xlu0 %496, %v443
        %v498 = vpop.permute.xlu0 %497
        %vm500 = vcmask 523264
        %v502 = vsel %vm500, %v428, 0
        %v505 = vsel %vm500, %v429, 0
        %v508 = vsel %vm500, %v430, 0
        %v511 = vsel %vm500, %v431, 0
        %v514 = vsel %vm500, %v432, 0
        %v517 = vsel %vm500, %v433, 0
        %v520 = vsel %vm500, %v434, 0
        %v523 = vsel %vm500, %v435, 0
        %525 = vmatprep.subr.mxu0 %v445
        %526 = vmatpush1.msra.mxu0 %v444
        %527 = vmatprep.subr.mxu0 %v447
        %528 = vmatpush1.msra.mxu0 %v446
        %529 = vmatprep.subr.mxu0 %v449
        %530 = vmatpush1.msra.mxu0 %v448
        %531 = vmatprep.subr.mxu0 %v451
        %532 = vmatpush1.msra.mxu0 %v450
        %533 = vmatprep.subr.mxu0 %v453
        %534 = vmatpush1.msra.mxu0 %v452
        %535 = vmatprep.subr.mxu0 %v455
        %536 = vmatpush1.msra.mxu0 %v454
        %537 = vmatprep.subr.mxu0 %v457
        %538 = vmatpush1.msra.mxu0 %v456
        %539 = vmatprep.subr.mxu0 %v459
        %540 = vmatpush1.msra.mxu0 %v458
        %541 = vmatprep.subr.mxu0 0.0
        %542 = vmatpush1.msra.mxu0 0.0
        %543 = vmatprep.subr.mxu0 0.0
        %544 = vmatpush1.msra.mxu0 0.0
        %545 = vmatprep.subr.mxu0 0.0
        %546 = vmatpush1.msra.mxu0 0.0
        %547 = vmatprep.subr.mxu0 0.0
        %548 = vmatpush1.msra.mxu0 0.0
        %549 = vmatprep.subr.mxu0 0.0
        %550 = vmatpush1.msra.mxu0 0.0
        %551 = vmatprep.subr.mxu0 0.0
        %552 = vmatpush1.msra.mxu0 0.0
        %553 = vmatprep.subr.mxu0 0.0
        %554 = vmatpush1.msra.mxu0 0.0
        %555 = vmatprep.subr.mxu0 0.0
        %556 = vmatpush1.msra.mxu0 0.0
        %557 = vmatprep.subr.mxu0 0.0
        %558 = vmatpush1.msra.mxu0 0.0
        %559 = vmatprep.subr.mxu0 0.0
        %560 = vmatpush1.msra.mxu0 0.0
        %561 = vmatprep.subr.mxu0 0.0
        %562 = vmatpush1.msra.mxu0 0.0
        %563 = vmatprep.subr.mxu0 0.0
        %564 = vmatpush1.msra.mxu0 0.0
        %565 = vmatprep.subr.mxu0 0.0
        %566 = vmatpush1.msra.mxu0 0.0
        %567 = vmatprep.subr.mxu0 0.0
        %568 = vmatpush1.msra.mxu0 0.0
        %569 = vmatprep.subr.mxu0 0.0
        %570 = vmatpush1.msra.mxu0 0.0
        %571 = vmatprep.subr.mxu0 0.0
        %572 = vmatpush1.msra.mxu0 0.0
        %573 = vmatprep.subr.mxu0 0.0
        %574 = vmatpush1.msra.mxu0 0.0
        %575 = vmatprep.subr.mxu0 0.0
        %576 = vmatpush1.msra.mxu0 0.0
        %577 = vmatprep.subr.mxu0 0.0
        %578 = vmatpush1.msra.mxu0 0.0
        %579 = vmatprep.subr.mxu0 0.0
        %580 = vmatpush1.msra.mxu0 0.0
        %581 = vmatprep.subr.mxu0 0.0
        %582 = vmatpush1.msra.mxu0 0.0
        %583 = vmatprep.subr.mxu0 0.0
        %584 = vmatpush1.msra.mxu0 0.0
        %585 = vmatprep.subr.mxu0 0.0
        %586 = vmatpush1.msra.mxu0 0.0
        %587 = vmatprep.subr.mxu0 0.0
        %588 = vmatpush1.msra.mxu0 0.0
        %589 = vmatprep.mubr.f32.mxu0 0.0
        %590 = vmatmul.mubr.f32.gmra.mrb[0].mxu0 %v502
        %v591 = vpop.f32.mrb[0].mxu0
        %v592 = vadd.f32 %v463, %v591
        %v593 = vpop.f32.mrb[0].mxu0
        %v594 = vadd.f32 %v463, %v593
        %595 = vmatprep.mubr.f32.mxu0 0.0
        %596 = vmatmul.mubr.f32.gmra.mrb[0].mxu0 %v505
        %v597 = vpop.f32.mrb[0].mxu0
        %v598 = vadd.f32 %v468, %v597
        %v599 = vpop.f32.mrb[0].mxu0
        %v600 = vadd.f32 %v468, %v599
        %601 = vmatprep.mubr.f32.mxu0 0.0
        %602 = vmatmul.mubr.f32.gmra.mrb[0].mxu0 %v508
        %v603 = vpop.f32.mrb[0].mxu0
        %v604 = vadd.f32 %v473, %v603
        %v605 = vpop.f32.mrb[0].mxu0
        %v606 = vadd.f32 %v473, %v605
        %607 = vmatprep.mubr.f32.mxu0 0.0
        %608 = vmatmul.mubr.f32.gmra.mrb[0].mxu0 %v511
        %v609 = vpop.f32.mrb[0].mxu0
        %v610 = vadd.f32 %v478, %v609
        %v611 = vpop.f32.mrb[0].mxu0
        %v612 = vadd.f32 %v478, %v611
        %613 = vmatprep.mubr.f32.mxu0 0.0
        %614 = vmatmul.mubr.f32.gmra.mrb[0].mxu0 %v514
        %v615 = vpop.f32.mrb[0].mxu0
        %v616 = vadd.f32 %v483, %v615
        %v617 = vpop.f32.mrb[0].mxu0
        %v618 = vadd.f32 %v483, %v617
        %619 = vmatprep.mubr.f32.mxu0 0.0
        %620 = vmatmul.mubr.f32.gmra.mrb[0].mxu0 %v517
        %v621 = vpop.f32.mrb[0].mxu0
        %v622 = vadd.f32 %v488, %v621
        %v623 = vpop.f32.mrb[0].mxu0
        %v624 = vadd.f32 %v488, %v623
        %625 = vmatprep.mubr.f32.mxu0 0.0
        %626 = vmatmul.mubr.f32.gmra.mrb[0].mxu0 %v520
        %v627 = vpop.f32.mrb[0].mxu0
        %v628 = vadd.f32 %v493, %v627
        %v629 = vpop.f32.mrb[0].mxu0
        %v630 = vadd.f32 %v493, %v629
        %631 = vmatprep.mubr.f32.mxu0 0.0
        %632 = vmatmul.mubr.f32.gmra.mrb[0].mxu0 %v523
        %v633 = vpop.f32.mrb[0].mxu0
        %v634 = vadd.f32 %v498, %v633
        %v635 = vpop.f32.mrb[0].mxu0
        %v636 = vadd.f32 %v498, %v635
        %637 = vdwg.mxu0
        %v638 = vmul.f32 %v592, 0.5
        %v639 = vmul.f32 %v594, 0.5
        %v640 = vmul.f32 %v598, 0.5
        %v641 = vmul.f32 %v600, 0.5
        %v642 = vmul.f32 %v604, 0.5
        %v643 = vmul.f32 %v606, 0.5
        %v644 = vmul.f32 %v610, 0.5
        %v645 = vmul.f32 %v612, 0.5
        %v646 = vmul.f32 %v616, 0.5
        %v647 = vmul.f32 %v618, 0.5
        %v648 = vmul.f32 %v622, 0.5
        %v649 = vmul.f32 %v624, 0.5
        %v650 = vmul.f32 %v628, 0.5
        %v651 = vmul.f32 %v630, 0.5
        %v652 = vmul.f32 %v634, 0.5
        %v653 = vmul.f32 %v636, 0.5
        %v654 = vtanh.pop %v638
        %v655 = vtanh.pop %v639
        %v656 = vtanh.pop %v640
        %v657 = vtanh.pop %v641
        %v658 = vtanh.pop %v642
        %v659 = vtanh.pop %v643
        %v660 = vtanh.pop %v644
        %v661 = vtanh.pop %v645
        %v662 = vtanh.pop %v646
        %v663 = vtanh.pop %v647
        %v664 = vtanh.pop %v648
        %v665 = vtanh.pop %v649
        %v666 = vtanh.pop %v650
        %v667 = vtanh.pop %v651
        %v668 = vtanh.pop %v652
        %v669 = vtanh.pop %v653
        %v670 = vmul.f32 %v654, 0.5
        %v671 = vmul.f32 %v655, 0.5
        %v672 = vmul.f32 %v656, 0.5
        %v673 = vmul.f32 %v657, 0.5
        %v674 = vmul.f32 %v658, 0.5
        %v675 = vmul.f32 %v659, 0.5
        %v676 = vmul.f32 %v660, 0.5
        %v677 = vmul.f32 %v661, 0.5
        %v678 = vmul.f32 %v662, 0.5
        %v679 = vmul.f32 %v663, 0.5
        %v680 = vmul.f32 %v664, 0.5
        %v681 = vmul.f32 %v665, 0.5
        %v682 = vmul.f32 %v666, 0.5
        %v683 = vmul.f32 %v667, 0.5
        %v684 = vmul.f32 %v668, 0.5
        %v685 = vmul.f32 %v669, 0.5
        %v686 = vadd.f32 %v670, 0.5
        %v687 = vadd.f32 %v671, 0.5
        %v688 = vadd.f32 %v672, 0.5
        %v689 = vadd.f32 %v673, 0.5
        %v690 = vadd.f32 %v674, 0.5
        %v691 = vadd.f32 %v675, 0.5
        %v692 = vadd.f32 %v676, 0.5
        %v693 = vadd.f32 %v677, 0.5
        %v694 = vadd.f32 %v678, 0.5
        %v695 = vadd.f32 %v679, 0.5
        %v696 = vadd.f32 %v680, 0.5
        %v697 = vadd.f32 %v681, 0.5
        %v698 = vadd.f32 %v682, 0.5
        %v699 = vadd.f32 %v683, 0.5
        %v700 = vadd.f32 %v684, 0.5
        %v701 = vadd.f32 %v685, 0.5
        %702 = vst [vmem:[%s407] sm:$0xff] %v686
        %703 = vst [vmem:[%s407 + $0x8] sm:$0xff] %v687
        %704 = vst [vmem:[%s407 + $0x10] sm:$0xff] %v688
        %705 = vst [vmem:[%s407 + $0x18] sm:$0xff] %v689
        %706 = vst [vmem:[%s407 + $0x20] sm:$0xff] %v690
        %707 = vst [vmem:[%s407 + $0x28] sm:$0xff] %v691
        %708 = vst [vmem:[%s407 + $0x30] sm:$0xff] %v692
        %709 = vst [vmem:[%s407 + $0x38] sm:$0xff] %v693
        %710 = vst [vmem:[%s407 + $0x40] sm:$0xff] %v694
        %711 = vst [vmem:[%s407 + $0x48] sm:$0xff] %v695
        %712 = vst [vmem:[%s407 + $0x50] sm:$0xff] %v696
        %713 = vst [vmem:[%s407 + $0x58] sm:$0xff] %v697
        %714 = vst [vmem:[%s407 + $0x60] sm:$0xff] %v698
        %715 = vst [vmem:[%s407 + $0x68] sm:$0xff] %v699
        %716 = vst [vmem:[%s407 + $0x70] sm:$0xff] %v700
        %717 = vst [vmem:[%s407 + $0x78] sm:$0xff] %v701
        %v718 = vld [vmem:[%s362] sm:$0xff]
        %v719 = vld [vmem:[%s362 + $0x8] sm:$0xff]
        %v720 = vld [vmem:[%s362 + $0x10] sm:$0xff]
        %v721 = vld [vmem:[%s362 + $0x18] sm:$0xff]
        %v722 = vld [vmem:[%s362 + $0x20] sm:$0xff]
        %v723 = vld [vmem:[%s362 + $0x28] sm:$0xff]
        %v724 = vld [vmem:[%s362 + $0x30] sm:$0xff]
        %v725 = vld [vmem:[%s362 + $0x38] sm:$0xff]
        %v726 = vld [vmem:[%s362 + $0x40] sm:$0xff]
        %v727 = vld [vmem:[%s362 + $0x48] sm:$0xff]
        %v728 = vld [vmem:[%s362 + $0x50] sm:$0xff]
        %v729 = vld [vmem:[%s362 + $0x58] sm:$0xff]
        %v730 = vld [vmem:[%s362 + $0x60] sm:$0xff]
        %v731 = vld [vmem:[%s362 + $0x68] sm:$0xff]
        %v732 = vld [vmem:[%s362 + $0x70] sm:$0xff]
        %v733 = vld [vmem:[%s362 + $0x78] sm:$0xff]
        %734 = vmatprep.subr.mxu0 %v719
        %735 = vmatpush1.msra.mxu0 %v718
        %736 = vmatprep.subr.mxu0 %v721
        %737 = vmatpush1.msra.mxu0 %v720
        %738 = vmatprep.subr.mxu0 %v723
        %739 = vmatpush1.msra.mxu0 %v722
        %740 = vmatprep.subr.mxu0 %v725
        %741 = vmatpush1.msra.mxu0 %v724
        %742 = vmatprep.subr.mxu0 %v727
        %743 = vmatpush1.msra.mxu0 %v726
        %744 = vmatprep.subr.mxu0 %v729
        %745 = vmatpush1.msra.mxu0 %v728
        %746 = vmatprep.subr.mxu0 %v731
        %747 = vmatpush1.msra.mxu0 %v730
        %748 = vmatprep.subr.mxu0 %v733
        %749 = vmatpush1.msra.mxu0 %v732
        %750 = vmatprep.subr.mxu0 0.0
        %751 = vmatpush1.msra.mxu0 0.0
        %752 = vmatprep.subr.mxu0 0.0
        %753 = vmatpush1.msra.mxu0 0.0
        %754 = vmatprep.subr.mxu0 0.0
        %755 = vmatpush1.msra.mxu0 0.0
        %756 = vmatprep.subr.mxu0 0.0
        %757 = vmatpush1.msra.mxu0 0.0
        %758 = vmatprep.subr.mxu0 0.0
        %759 = vmatpush1.msra.mxu0 0.0
        %760 = vmatprep.subr.mxu0 0.0
        %761 = vmatpush1.msra.mxu0 0.0
        %762 = vmatprep.subr.mxu0 0.0
        %763 = vmatpush1.msra.mxu0 0.0
        %764 = vmatprep.subr.mxu0 0.0
        %765 = vmatpush1.msra.mxu0 0.0
        %766 = vmatprep.subr.mxu0 0.0
        %767 = vmatpush1.msra.mxu0 0.0
        %768 = vmatprep.subr.mxu0 0.0
        %769 = vmatpush1.msra.mxu0 0.0
        %770 = vmatprep.subr.mxu0 0.0
        %771 = vmatpush1.msra.mxu0 0.0
        %772 = vmatprep.subr.mxu0 0.0
        %773 = vmatpush1.msra.mxu0 0.0
        %774 = vmatprep.subr.mxu0 0.0
        %775 = vmatpush1.msra.mxu0 0.0
        %776 = vmatprep.subr.mxu0 0.0
        %777 = vmatpush1.msra.mxu0 0.0
        %778 = vmatprep.subr.mxu0 0.0
        %779 = vmatpush1.msra.mxu0 0.0
        %780 = vmatprep.subr.mxu0 0.0
        %781 = vmatpush1.msra.mxu0 0.0
        %782 = vmatprep.subr.mxu0 0.0
        %783 = vmatpush1.msra.mxu0 0.0
        %784 = vmatprep.subr.mxu0 0.0
        %785 = vmatpush1.msra.mxu0 0.0
        %786 = vmatprep.subr.mxu0 0.0
        %787 = vmatpush1.msra.mxu0 0.0
        %788 = vmatprep.subr.mxu0 0.0
        %789 = vmatpush1.msra.mxu0 0.0
        %790 = vmatprep.subr.mxu0 0.0
        %791 = vmatpush1.msra.mxu0 0.0
        %792 = vmatprep.subr.mxu0 0.0
        %793 = vmatpush1.msra.mxu0 0.0
        %794 = vmatprep.subr.mxu0 0.0
        %795 = vmatpush1.msra.mxu0 0.0
        %796 = vmatprep.subr.mxu0 0.0
        %797 = vmatpush1.msra.mxu0 0.0
        %798 = vmatprep.mubr.f32.mxu0 0.0
        %799 = vmatmul.mubr.f32.gmra.mrb[0].mxu0 %v502
        %v800 = vpop.f32.mrb[0].mxu0
        %v801 = vadd.f32 %v463, %v800
        %v802 = vpop.f32.mrb[0].mxu0
        %v803 = vadd.f32 %v463, %v802
        %804 = vmatprep.mubr.f32.mxu0 0.0
        %805 = vmatmul.mubr.f32.gmra.mrb[0].mxu0 %v505
        %v806 = vpop.f32.mrb[0].mxu0
        %v807 = vadd.f32 %v468, %v806
        %v808 = vpop.f32.mrb[0].mxu0
        %v809 = vadd.f32 %v468, %v808
        %810 = vmatprep.mubr.f32.mxu0 0.0
        %811 = vmatmul.mubr.f32.gmra.mrb[0].mxu0 %v508
        %v812 = vpop.f32.mrb[0].mxu0
        %v813 = vadd.f32 %v473, %v812
        %v814 = vpop.f32.mrb[0].mxu0
        %v815 = vadd.f32 %v473, %v814
        %816 = vmatprep.mubr.f32.mxu0 0.0
        %817 = vmatmul.mubr.f32.gmra.mrb[0].mxu0 %v511
        %v818 = vpop.f32.mrb[0].mxu0
        %v819 = vadd.f32 %v478, %v818
        %v820 = vpop.f32.mrb[0].mxu0
        %v821 = vadd.f32 %v478, %v820
        %822 = vmatprep.mubr.f32.mxu0 0.0
        %823 = vmatmul.mubr.f32.gmra.mrb[0].mxu0 %v514
        %v824 = vpop.f32.mrb[0].mxu0
        %v825 = vadd.f32 %v483, %v824
        %v826 = vpop.f32.mrb[0].mxu0
        %v827 = vadd.f32 %v483, %v826
        %828 = vmatprep.mubr.f32.mxu0 0.0
        %829 = vmatmul.mubr.f32.gmra.mrb[0].mxu0 %v517
        %v830 = vpop.f32.mrb[0].mxu0
        %v831 = vadd.f32 %v488, %v830
        %v832 = vpop.f32.mrb[0].mxu0
        %v833 = vadd.f32 %v488, %v832
        %834 = vmatprep.mubr.f32.mxu0 0.0
        %835 = vmatmul.mubr.f32.gmra.mrb[0].mxu0 %v520
        %v836 = vpop.f32.mrb[0].mxu0
        %v837 = vadd.f32 %v493, %v836
        %v838 = vpop.f32.mrb[0].mxu0
        %v839 = vadd.f32 %v493, %v838
        %840 = vmatprep.mubr.f32.mxu0 0.0
        %841 = vmatmul.mubr.f32.gmra.mrb[0].mxu0 %v523
        %v842 = vpop.f32.mrb[0].mxu0
        %v843 = vadd.f32 %v498, %v842
        %v844 = vpop.f32.mrb[0].mxu0
        %v845 = vadd.f32 %v498, %v844
        %846 = vdwg.mxu0
        %v847 = vmul.f32 %v801, 0.5
        %v848 = vmul.f32 %v803, 0.5
        %v849 = vmul.f32 %v807, 0.5
        %v850 = vmul.f32 %v809, 0.5
        %v851 = vmul.f32 %v813, 0.5
        %v852 = vmul.f32 %v815, 0.5
        %v853 = vmul.f32 %v819, 0.5
        %v854 = vmul.f32 %v821, 0.5
        %v855 = vmul.f32 %v825, 0.5
        %v856 = vmul.f32 %v827, 0.5
        %v857 = vmul.f32 %v831, 0.5
        %v858 = vmul.f32 %v833, 0.5
        %v859 = vmul.f32 %v837, 0.5
        %v860 = vmul.f32 %v839, 0.5
        %v861 = vmul.f32 %v843, 0.5
        %v862 = vmul.f32 %v845, 0.5
        %v863 = vtanh.pop %v847
        %v864 = vtanh.pop %v848
        %v865 = vtanh.pop %v849
        %v866 = vtanh.pop %v850
        %v867 = vtanh.pop %v851
        %v868 = vtanh.pop %v852
        %v869 = vtanh.pop %v853
        %v870 = vtanh.pop %v854
        %v871 = vtanh.pop %v855
        %v872 = vtanh.pop %v856
        %v873 = vtanh.pop %v857
        %v874 = vtanh.pop %v858
        %v875 = vtanh.pop %v859
        %v876 = vtanh.pop %v860
        %v877 = vtanh.pop %v861
        %v878 = vtanh.pop %v862
        %v879 = vmul.f32 %v863, 0.5
        %v880 = vmul.f32 %v864, 0.5
        %v881 = vmul.f32 %v865, 0.5
        %v882 = vmul.f32 %v866, 0.5
        %v883 = vmul.f32 %v867, 0.5
        %v884 = vmul.f32 %v868, 0.5
        %v885 = vmul.f32 %v869, 0.5
        %v886 = vmul.f32 %v870, 0.5
        %v887 = vmul.f32 %v871, 0.5
        %v888 = vmul.f32 %v872, 0.5
        %v889 = vmul.f32 %v873, 0.5
        %v890 = vmul.f32 %v874, 0.5
        %v891 = vmul.f32 %v875, 0.5
        %v892 = vmul.f32 %v876, 0.5
        %v893 = vmul.f32 %v877, 0.5
        %v894 = vmul.f32 %v878, 0.5
        %v895 = vadd.f32 %v879, 0.5
        %v896 = vadd.f32 %v880, 0.5
        %v897 = vadd.f32 %v881, 0.5
        %v898 = vadd.f32 %v882, 0.5
        %v899 = vadd.f32 %v883, 0.5
        %v900 = vadd.f32 %v884, 0.5
        %v901 = vadd.f32 %v885, 0.5
        %v902 = vadd.f32 %v886, 0.5
        %v903 = vadd.f32 %v887, 0.5
        %v904 = vadd.f32 %v888, 0.5
        %v905 = vadd.f32 %v889, 0.5
        %v906 = vadd.f32 %v890, 0.5
        %v907 = vadd.f32 %v891, 0.5
        %v908 = vadd.f32 %v892, 0.5
        %v909 = vadd.f32 %v893, 0.5
        %v910 = vadd.f32 %v894, 0.5
        %911 = vst [vmem:[%s414] sm:$0xff] %v895
        %912 = vst [vmem:[%s414 + $0x8] sm:$0xff] %v896
        %913 = vst [vmem:[%s414 + $0x10] sm:$0xff] %v897
        %914 = vst [vmem:[%s414 + $0x18] sm:$0xff] %v898
        %915 = vst [vmem:[%s414 + $0x20] sm:$0xff] %v899
        %916 = vst [vmem:[%s414 + $0x28] sm:$0xff] %v900
        %917 = vst [vmem:[%s414 + $0x30] sm:$0xff] %v901
        %918 = vst [vmem:[%s414 + $0x38] sm:$0xff] %v902
        %919 = vst [vmem:[%s414 + $0x40] sm:$0xff] %v903
        %920 = vst [vmem:[%s414 + $0x48] sm:$0xff] %v904
        %921 = vst [vmem:[%s414 + $0x50] sm:$0xff] %v905
        %922 = vst [vmem:[%s414 + $0x58] sm:$0xff] %v906
        %923 = vst [vmem:[%s414 + $0x60] sm:$0xff] %v907
        %924 = vst [vmem:[%s414 + $0x68] sm:$0xff] %v908
        %925 = vst [vmem:[%s414 + $0x70] sm:$0xff] %v909
        %926 = vst [vmem:[%s414 + $0x78] sm:$0xff] %v910
        %v927 = vld [vmem:[%s371] sm:$0xff]
        %v928 = vld [vmem:[%s371 + $0x8] sm:$0xff]
        %v929 = vld [vmem:[%s371 + $0x10] sm:$0xff]
        %v930 = vld [vmem:[%s371 + $0x18] sm:$0xff]
        %v931 = vld [vmem:[%s371 + $0x20] sm:$0xff]
        %v932 = vld [vmem:[%s371 + $0x28] sm:$0xff]
        %v933 = vld [vmem:[%s371 + $0x30] sm:$0xff]
        %v934 = vld [vmem:[%s371 + $0x38] sm:$0xff]
        %v935 = vld [vmem:[%s371 + $0x40] sm:$0xff]
        %v936 = vld [vmem:[%s371 + $0x48] sm:$0xff]
        %v937 = vld [vmem:[%s371 + $0x50] sm:$0xff]
        %v938 = vld [vmem:[%s371 + $0x58] sm:$0xff]
        %v939 = vld [vmem:[%s371 + $0x60] sm:$0xff]
        %v940 = vld [vmem:[%s371 + $0x68] sm:$0xff]
        %v941 = vld [vmem:[%s371 + $0x70] sm:$0xff]
        %v942 = vld [vmem:[%s371 + $0x78] sm:$0xff]
        %943 = vmatprep.subr.mxu0 %v928
        %944 = vmatpush1.msra.mxu0 %v927
        %945 = vmatprep.subr.mxu0 %v930
        %946 = vmatpush1.msra.mxu0 %v929
        %947 = vmatprep.subr.mxu0 %v932
        %948 = vmatpush1.msra.mxu0 %v931
        %949 = vmatprep.subr.mxu0 %v934
        %950 = vmatpush1.msra.mxu0 %v933
        %951 = vmatprep.subr.mxu0 %v936
        %952 = vmatpush1.msra.mxu0 %v935
        %953 = vmatprep.subr.mxu0 %v938
        %954 = vmatpush1.msra.mxu0 %v937
        %955 = vmatprep.subr.mxu0 %v940
        %956 = vmatpush1.msra.mxu0 %v939
        %957 = vmatprep.subr.mxu0 %v942
        %958 = vmatpush1.msra.mxu0 %v941
        %959 = vmatprep.subr.mxu0 0.0
        %960 = vmatpush1.msra.mxu0 0.0
        %961 = vmatprep.subr.mxu0 0.0
        %962 = vmatpush1.msra.mxu0 0.0
        %963 = vmatprep.subr.mxu0 0.0
        %964 = vmatpush1.msra.mxu0 0.0
        %965 = vmatprep.subr.mxu0 0.0
        %966 = vmatpush1.msra.mxu0 0.0
        %967 = vmatprep.subr.mxu0 0.0
        %968 = vmatpush1.msra.mxu0 0.0
        %969 = vmatprep.subr.mxu0 0.0
        %970 = vmatpush1.msra.mxu0 0.0
        %971 = vmatprep.subr.mxu0 0.0
        %972 = vmatpush1.msra.mxu0 0.0
        %973 = vmatprep.subr.mxu0 0.0
        %974 = vmatpush1.msra.mxu0 0.0
        %975 = vmatprep.subr.mxu0 0.0
        %976 = vmatpush1.msra.mxu0 0.0
        %977 = vmatprep.subr.mxu0 0.0
        %978 = vmatpush1.msra.mxu0 0.0
        %979 = vmatprep.subr.mxu0 0.0
        %980 = vmatpush1.msra.mxu0 0.0
        %981 = vmatprep.subr.mxu0 0.0
        %982 = vmatpush1.msra.mxu0 0.0
        %983 = vmatprep.subr.mxu0 0.0
        %984 = vmatpush1.msra.mxu0 0.0
        %985 = vmatprep.subr.mxu0 0.0
        %986 = vmatpush1.msra.mxu0 0.0
        %987 = vmatprep.subr.mxu0 0.0
        %988 = vmatpush1.msra.mxu0 0.0
        %989 = vmatprep.subr.mxu0 0.0
        %990 = vmatpush1.msra.mxu0 0.0
        %991 = vmatprep.subr.mxu0 0.0
        %992 = vmatpush1.msra.mxu0 0.0
        %993 = vmatprep.subr.mxu0 0.0
        %994 = vmatpush1.msra.mxu0 0.0
        %995 = vmatprep.subr.mxu0 0.0
        %996 = vmatpush1.msra.mxu0 0.0
        %997 = vmatprep.subr.mxu0 0.0
        %998 = vmatpush1.msra.mxu0 0.0
        %999 = vmatprep.subr.mxu0 0.0
        %1000 = vmatpush1.msra.mxu0 0.0
        %1001 = vmatprep.subr.mxu0 0.0
        %1002 = vmatpush1.msra.mxu0 0.0
        %1003 = vmatprep.subr.mxu0 0.0
        %1004 = vmatpush1.msra.mxu0 0.0
        %1005 = vmatprep.subr.mxu0 0.0
        %1006 = vmatpush1.msra.mxu0 0.0
        %1007 = vmatprep.mubr.f32.mxu0 0.0
        %1008 = vmatmul.mubr.f32.gmra.mrb[0].mxu0 %v502
        %v1009 = vpop.f32.mrb[0].mxu0
        %v1010 = vadd.f32 %v463, %v1009
        %v1011 = vpop.f32.mrb[0].mxu0
        %v1012 = vadd.f32 %v463, %v1011
        %1013 = vmatprep.mubr.f32.mxu0 0.0
        %1014 = vmatmul.mubr.f32.gmra.mrb[0].mxu0 %v505
        %v1015 = vpop.f32.mrb[0].mxu0
        %v1016 = vadd.f32 %v468, %v1015
        %v1017 = vpop.f32.mrb[0].mxu0
        %v1018 = vadd.f32 %v468, %v1017
        %1019 = vmatprep.mubr.f32.mxu0 0.0
        %1020 = vmatmul.mubr.f32.gmra.mrb[0].mxu0 %v508
        %v1021 = vpop.f32.mrb[0].mxu0
        %v1022 = vadd.f32 %v473, %v1021
        %v1023 = vpop.f32.mrb[0].mxu0
        %v1024 = vadd.f32 %v473, %v1023
        %1025 = vmatprep.mubr.f32.mxu0 0.0
        %1026 = vmatmul.mubr.f32.gmra.mrb[0].mxu0 %v511
        %v1027 = vpop.f32.mrb[0].mxu0
        %v1028 = vadd.f32 %v478, %v1027
        %v1029 = vpop.f32.mrb[0].mxu0
        %v1030 = vadd.f32 %v478, %v1029
        %1031 = vmatprep.mubr.f32.mxu0 0.0
        %1032 = vmatmul.mubr.f32.gmra.mrb[0].mxu0 %v514
        %v1033 = vpop.f32.mrb[0].mxu0
        %v1034 = vadd.f32 %v483, %v1033
        %v1035 = vpop.f32.mrb[0].mxu0
        %v1036 = vadd.f32 %v483, %v1035
        %1037 = vmatprep.mubr.f32.mxu0 0.0
        %1038 = vmatmul.mubr.f32.gmra.mrb[0].mxu0 %v517
        %v1039 = vpop.f32.mrb[0].mxu0
        %v1040 = vadd.f32 %v488, %v1039
        %v1041 = vpop.f32.mrb[0].mxu0
        %v1042 = vadd.f32 %v488, %v1041
        %1043 = vmatprep.mubr.f32.mxu0 0.0
        %1044 = vmatmul.mubr.f32.gmra.mrb[0].mxu0 %v520
        %v1045 = vpop.f32.mrb[0].mxu0
        %v1046 = vadd.f32 %v493, %v1045
        %v1047 = vpop.f32.mrb[0].mxu0
        %v1048 = vadd.f32 %v493, %v1047
        %1049 = vmatprep.mubr.f32.mxu0 0.0
        %1050 = vmatmul.mubr.f32.gmra.mrb[0].mxu0 %v523
        %v1051 = vpop.f32.mrb[0].mxu0
        %v1052 = vadd.f32 %v498, %v1051
        %v1053 = vpop.f32.mrb[0].mxu0
        %v1054 = vadd.f32 %v498, %v1053
        %1055 = vdwg.mxu0
        %v1056 = vmul.f32 %v1010, 0.5
        %v1057 = vmul.f32 %v1012, 0.5
        %v1058 = vmul.f32 %v1016, 0.5
        %v1059 = vmul.f32 %v1018, 0.5
        %v1060 = vmul.f32 %v1022, 0.5
        %v1061 = vmul.f32 %v1024, 0.5
        %v1062 = vmul.f32 %v1028, 0.5
        %v1063 = vmul.f32 %v1030, 0.5
        %v1064 = vmul.f32 %v1034, 0.5
        %v1065 = vmul.f32 %v1036, 0.5
        %v1066 = vmul.f32 %v1040, 0.5
        %v1067 = vmul.f32 %v1042, 0.5
        %v1068 = vmul.f32 %v1046, 0.5
        %v1069 = vmul.f32 %v1048, 0.5
        %v1070 = vmul.f32 %v1052, 0.5
        %v1071 = vmul.f32 %v1054, 0.5
        %v1072 = vtanh.pop %v1056
        %v1073 = vtanh.pop %v1057
        %v1074 = vtanh.pop %v1058
        %v1075 = vtanh.pop %v1059
        %v1076 = vtanh.pop %v1060
        %v1077 = vtanh.pop %v1061
        %v1078 = vtanh.pop %v1062
        %v1079 = vtanh.pop %v1063
        %v1080 = vtanh.pop %v1064
        %v1081 = vtanh.pop %v1065
        %v1082 = vtanh.pop %v1066
        %v1083 = vtanh.pop %v1067
        %v1084 = vtanh.pop %v1068
        %v1085 = vtanh.pop %v1069
        %v1086 = vtanh.pop %v1070
        %v1087 = vtanh.pop %v1071
        %v1088 = vmul.f32 %v1072, 0.5
        %v1089 = vmul.f32 %v1073, 0.5
        %v1090 = vmul.f32 %v1074, 0.5
        %v1091 = vmul.f32 %v1075, 0.5
        %v1092 = vmul.f32 %v1076, 0.5
        %v1093 = vmul.f32 %v1077, 0.5
        %v1094 = vmul.f32 %v1078, 0.5
        %v1095 = vmul.f32 %v1079, 0.5
        %v1096 = vmul.f32 %v1080, 0.5
        %v1097 = vmul.f32 %v1081, 0.5
        %v1098 = vmul.f32 %v1082, 0.5
        %v1099 = vmul.f32 %v1083, 0.5
        %v1100 = vmul.f32 %v1084, 0.5
        %v1101 = vmul.f32 %v1085, 0.5
        %v1102 = vmul.f32 %v1086, 0.5
        %v1103 = vmul.f32 %v1087, 0.5
        %v1104 = vadd.f32 %v1088, 0.5
        %v1105 = vadd.f32 %v1089, 0.5
        %v1106 = vadd.f32 %v1090, 0.5
        %v1107 = vadd.f32 %v1091, 0.5
        %v1108 = vadd.f32 %v1092, 0.5
        %v1109 = vadd.f32 %v1093, 0.5
        %v1110 = vadd.f32 %v1094, 0.5
        %v1111 = vadd.f32 %v1095, 0.5
        %v1112 = vadd.f32 %v1096, 0.5
        %v1113 = vadd.f32 %v1097, 0.5
        %v1114 = vadd.f32 %v1098, 0.5
        %v1115 = vadd.f32 %v1099, 0.5
        %v1116 = vadd.f32 %v1100, 0.5
        %v1117 = vadd.f32 %v1101, 0.5
        %v1118 = vadd.f32 %v1102, 0.5
        %v1119 = vadd.f32 %v1103, 0.5
        %1120 = vst [vmem:[%s421] sm:$0xff] %v1104
        %1121 = vst [vmem:[%s421 + $0x8] sm:$0xff] %v1105
        %1122 = vst [vmem:[%s421 + $0x10] sm:$0xff] %v1106
        %1123 = vst [vmem:[%s421 + $0x18] sm:$0xff] %v1107
        %1124 = vst [vmem:[%s421 + $0x20] sm:$0xff] %v1108
        %1125 = vst [vmem:[%s421 + $0x28] sm:$0xff] %v1109
        %1126 = vst [vmem:[%s421 + $0x30] sm:$0xff] %v1110
        %1127 = vst [vmem:[%s421 + $0x38] sm:$0xff] %v1111
        %1128 = vst [vmem:[%s421 + $0x40] sm:$0xff] %v1112
        %1129 = vst [vmem:[%s421 + $0x48] sm:$0xff] %v1113
        %1130 = vst [vmem:[%s421 + $0x50] sm:$0xff] %v1114
        %1131 = vst [vmem:[%s421 + $0x58] sm:$0xff] %v1115
        %1132 = vst [vmem:[%s421 + $0x60] sm:$0xff] %v1116
        %1133 = vst [vmem:[%s421 + $0x68] sm:$0xff] %v1117
        %1134 = vst [vmem:[%s421 + $0x70] sm:$0xff] %v1118
        %1135 = vst [vmem:[%s421 + $0x78] sm:$0xff] %v1119
        %s1136 = sand.u32 %s179, 1
        %s1137 = scalar_lea.sflag [#allocation4], %s1136
        %s1138 = sand.u32 %s179, 1
        %s1139 = smul.addr %s1138, 128
        %s1140 = scalar_lea.vmem [#allocation8], %s1139
        %s1141 = sand.u32 %s31, 1
        %s1142 = scalar_lea.sflag [#allocation10], %s1141
        %s1143 = sand.u32 %s207, 1
        %s1144 = smul.addr %s1143, 128
        %s1145 = scalar_lea.vmem [#allocation9], %s1144
        %s1146 = sand.u32 %s31, 1
        %s1147 = scalar_lea.sflag [#allocation10], %s1146
        %s1148 = sand.u32 %s235, 1
        %s1149 = smul.addr %s1148, 128
        %s1150 = scalar_lea.vmem [#allocation11], %s1149
        // Predicated region
        $region53: #{tpu_custom_call.1} parent=39 // pred_check
          %p1151 = pneg %p189
        $region54: #{tpu_custom_call.1} parent=39 // pred_check_branch
          %1153 = sbr.rel (%p1151) target = $region56
        $region55: #{tpu_custom_call.1} parent=39 // pred_region
          %s1154 = smul.u32 2, %s36
          %s1156 = ssub.s32 2048, 2048
          %1157 = vsyncadd %s1137, %s1156
          %s1158 = smul.addr %s35, 16
          %s1159 = sadd.s32 %s1154, %s1158
          %s1160 = smul.addr %s1159, 128
          %s1161 = scalar_lea.hbm %s5, %s1160
          %s1162 = sshll.u32 %s1140, 4
          %s1163 = int_to_ptr.vmem [resolvable:$true] %s1162
          %1168 = dma.vmem_to_hbm [thread:$0]  %s1163, 2048, %s1161, %s1137, 256, 256, 16
        $region56: #{tpu_custom_call.1} parent=39 // pred_fallthru
          _
        // Predicated region
        $region57: #{tpu_custom_call.1} parent=39 // pred_check
          %p1169 = pneg %p217
        $region58: #{tpu_custom_call.1} parent=39 // pred_check_branch
          %1171 = sbr.rel (%p1169) target = $region60
        $region59: #{tpu_custom_call.1} parent=39 // pred_region
          %s1172 = smul.u32 2, %s36
          %s1174 = ssub.s32 2048, 2048
          %1175 = vsyncadd %s1142, %s1174
          %s1176 = smul.addr %s35, 16
          %s1177 = sadd.s32 %s1172, %s1176
          %s1178 = smul.addr %s1177, 128
          %s1179 = scalar_lea.hbm %s6, %s1178
          %s1180 = sshll.u32 %s1145, 4
          %s1181 = int_to_ptr.vmem [resolvable:$true] %s1180
          %1186 = dma.vmem_to_hbm [thread:$0]  %s1181, 2048, %s1179, %s1142, 256, 256, 16
        $region60: #{tpu_custom_call.1} parent=39 // pred_fallthru
          _
        // Predicated region
        $region61: #{tpu_custom_call.1} parent=39 // pred_check
          %p1187 = pneg %p245
        $region62: #{tpu_custom_call.1} parent=39 // pred_check_branch
          %1189 = sbr.rel (%p1187) target = $region64
        $region63: #{tpu_custom_call.1} parent=39 // pred_region
          %s1190 = smul.u32 2, %s36
          %s1192 = ssub.s32 2048, 2048
          %1193 = vsyncadd %s1147, %s1192
          %s1194 = smul.addr %s35, 16
          %s1195 = sadd.s32 %s1190, %s1194
          %s1196 = smul.addr %s1195, 128
          %s1197 = scalar_lea.hbm %s7, %s1196
          %s1198 = sshll.u32 %s1150, 4
          %s1199 = int_to_ptr.vmem [resolvable:$true] %s1198
          %1204 = dma.vmem_to_hbm [thread:$0]  %s1199, 2048, %s1197, %s1147, 256, 256, 16
        $region64: #{tpu_custom_call.1} parent=39 // pred_fallthru
          _
      $region40: #{tpu_custom_call.1} parent=5 // pred_fallthru
        _
      %p1205 = scmp.le.s32.totalorder 2, %s26
      // Predicated region
      $region65: #{tpu_custom_call.1} parent=5 // pred_check
        %p1206 = pneg %p1205
      $region66: #{tpu_custom_call.1} parent=5 // pred_check_branch
        %1208 = sbr.rel (%p1206) target = $region68
      $region67: #{tpu_custom_call.1} parent=5 // pred_region
        %s1209 = ssub.s32 %s26, 2
        // Predicated region
        $region69: #{tpu_custom_call.1} parent=67 // pred_check
          %p1210 = pneg %p195
        $region70: #{tpu_custom_call.1} parent=67 // pred_check_branch
          %1212 = sbr.rel (%p1210) target = $region72
        $region71: #{tpu_custom_call.1} parent=67 // pred_region
          %s1213 = sand.u32 %s180, 1
          %s1214 = scalar_lea.sflag [#allocation4], %s1213
          %s1215 = sand.u32 %s180, 1
          %s1216 = smul.addr %s1215, 128
          %s1217 = scalar_lea.vmem [#allocation8], %s1216
          %1218 = dma.done %s1214, 2048
        $region72: #{tpu_custom_call.1} parent=67 // pred_fallthru
          _
        // Predicated region
        $region73: #{tpu_custom_call.1} parent=67 // pred_check
          %p1219 = pneg %p223
        $region74: #{tpu_custom_call.1} parent=67 // pred_check_branch
          %1221 = sbr.rel (%p1219) target = $region76
        $region75: #{tpu_custom_call.1} parent=67 // pred_region
          %s1222 = sand.u32 %s32, 1
          %s1223 = scalar_lea.sflag [#allocation10], %s1222
          %s1224 = sand.u32 %s208, 1
          %s1225 = smul.addr %s1224, 128
          %s1226 = scalar_lea.vmem [#allocation9], %s1225
          %1227 = dma.done %s1223, 2048
        $region76: #{tpu_custom_call.1} parent=67 // pred_fallthru
          _
        // Predicated region
        $region77: #{tpu_custom_call.1} parent=67 // pred_check
          %p1228 = pneg %p251
        $region78: #{tpu_custom_call.1} parent=67 // pred_check_branch
          %1230 = sbr.rel (%p1228) target = $region80
        $region79: #{tpu_custom_call.1} parent=67 // pred_region
          %s1231 = sand.u32 %s32, 1
          %s1232 = scalar_lea.sflag [#allocation10], %s1231
          %s1233 = sand.u32 %s236, 1
          %s1234 = smul.addr %s1233, 128
          %s1235 = scalar_lea.vmem [#allocation11], %s1234
          %1236 = dma.done %s1232, 2048
        $region80: #{tpu_custom_call.1} parent=67 // pred_fallthru
          _
      $region68: #{tpu_custom_call.1} parent=5 // pred_fallthru
        _
    $region6: #{tpu_custom_call.1} parent=1 // loop_footer
      %s30 = sadd.s32 1, %s26
    $region7: #{tpu_custom_call.1} parent=1 // loop_footer_branch
      %25 = sbr.rel target = $region3
    $region8: #{tpu_custom_call.1} parent=1 // loop_exit
      _
    %1237 = vsyncpa [#allocation3], 1
    %s1238 = scalar_lea.sflag [#allocation3], 1
    %1239 = vsyncpa %s1238, 1
    %1240 = vsyncpa [#allocation6], 1
    %s1241 = scalar_lea.sflag [#allocation6], 1
    %1242 = vsyncpa %s1241, 1
    %1243 = vsyncpa [#allocation4], 1
    %s1244 = scalar_lea.sflag [#allocation4], 1
    %1245 = vsyncpa %s1244, 1
    %1246 = vsyncpa [#allocation10], 1
    %s1247 = scalar_lea.sflag [#allocation10], 1
    %1248 = vsyncpa %s1247, 1

</llo_original>
